<compile_context>
chip_gen: v7x
topology: tpu7x:2x2x1
jax: 0.10.0
libtpu: 0.0.40
codegen_flags: <defaults>
</compile_context>

<pallas_src>
import functools
import math

import jax
import jax.numpy as jnp
from jax.experimental import pallas as pl
from jax.experimental.pallas import tpu as pltpu


def _round_up(x, m):
    return (x + m - 1) // m * m


def _equal_conv2d_kernel(x_ref, w_ref, b_ref, o_ref, k_ref, *,
                         Wp, KH, KW, C_pad, Lo_pad):
    # x_ref: (C_pad, L)        one image, flattened zero-padded spatial axis
    # w_ref: (OC_pad, K)       equal-LR-scaled weight, K = KH*KW*C_pad (resident)
    # b_ref: (OC_pad, 1)       f32 bias (resident, unscaled)
    # o_ref: (OC_pad, Lo_pad)  lane-dense output on the flat padded-spatial axis
    # k_ref: (K, Lo_pad)       VMEM scratch: stacked shifted slabs (im2col block)
    x = x_ref[...]                              # single VMEM load of the image
    for kh in range(KH):
        for kw in range(KW):
            off = kh * Wp + kw                  # conv tap == constant lane shift
            r0 = (kh * KW + kw) * C_pad
            # The shifted slab is written straight into the stacked-K block;
            # this store is the only per-tap work (the lane shift rides on the
            # static slice lowering), replacing a per-tap matmul + acc add.
            k_ref[r0:r0 + C_pad, :] = x[:, off:off + Lo_pad]
    # One fused matmul over K = KH*KW*C_pad; f32 accumulation on the MXU.
    acc = jnp.dot(w_ref[...], k_ref[...], preferred_element_type=jnp.float32)
    o_ref[...] = (acc + b_ref[...]).astype(o_ref.dtype)


def equal_conv2d(x, weight_orig, bias, gain=1.0, padding=1, stride=1,
                 compute_dtype=None):
    """EqualConv2d forward. x: [N, C, H, W] (NCHW); weight_orig: [OC, C, KH, KW].

    compute_dtype: optionally jnp.bfloat16 to feed the MXU bf16 inputs
    (v5e fast path); default keeps the input dtype. Accumulation is f32 either way.
    """
    assert stride == 1, "equal_conv2d Pallas kernel only supports stride=1"
    assert isinstance(padding, int) and padding >= 0, "symmetric int padding only"

    N, C, H, W = x.shape
    OC, C_w, KH, KW = weight_orig.shape
    assert C == C_w

    Hp, Wp = H + 2 * padding, W + 2 * padding
    H_out, W_out = Hp - KH + 1, Wp - KW + 1

    fan_in = C * KH * KW                               # original C (pre-padding)
    scale = float(math.sqrt(2.0 / fan_in) * gain)      # compile-time constant

    cdtype = jnp.dtype(compute_dtype) if compute_dtype is not None else x.dtype

    # sublane / lane friendly padded sizes
    C_pad = _round_up(C, 8)
    OC_pad = _round_up(OC, 8)
    K = KH * KW * C_pad                                # fused contraction depth
    Lo = H_out * Wp                                    # flat output length we keep
    Lo_pad = _round_up(Lo, 128)                        # lane-dense output width
    max_off = (KH - 1) * Wp + (KW - 1)                 # largest conv-tap lane shift
    # flat input length must cover every shifted Lo_pad-wide window
    extra_rows = max(0, -(-(Lo_pad + max_off - Hp * Wp) // Wp))
    L = (Hp + extra_rows) * Wp

    # ONE pad (channel pad + conv halo, with the bottom rows extended to also
    # provide the flat-tail padding) + ONE reshape: the only wrapper pass over x.
    xf = jnp.pad(x, ((0, 0), (0, C_pad - C),
                     (padding, padding + extra_rows), (padding, padding)))
    xf = xf.reshape(N, C_pad, L).astype(cdtype)

    # Equalized-LR scale baked into the small fused weight tile (OC_pad, K);
    # K laid out as (kh, kw, c) to match the stacked slabs in the kernel.
    w = (weight_orig * scale).astype(cdtype)
    w = jnp.transpose(w, (0, 2, 3, 1))                              # (OC, KH, KW, C)
    w = jnp.pad(w, ((0, OC_pad - OC), (0, 0), (0, 0), (0, C_pad - C)))
    w_fused = w.reshape(OC_pad, K)
    b_t = jnp.pad(bias, (0, OC_pad - OC)).astype(jnp.float32).reshape(OC_pad, 1)

    kernel = functools.partial(_equal_conv2d_kernel, Wp=Wp, KH=KH, KW=KW,
                               C_pad=C_pad, Lo_pad=Lo_pad)

    # Scoped-VMEM limit sized to the working set with generous headroom
    # (harmless when larger than needed; avoids starving the x/out tiles).
    cbytes = jnp.dtype(cdtype).itemsize
    obytes = jnp.dtype(x.dtype).itemsize
    lp = lambda v: _round_up(v, 128)
    vmem_est = (2 * C_pad * lp(L) * cbytes          # x, double-buffered
                + 2 * OC_pad * Lo_pad * obytes      # out, double-buffered
                + 2 * OC_pad * lp(K) * cbytes       # weight (resident)
                + 2 * OC_pad * 128 * 4              # bias (resident)
                + K * Lo_pad * cbytes)              # stacked-K scratch
    vmem_limit = int(min(64 * 1024 * 1024, max(8 * 1024 * 1024, 2 * vmem_est)))

    out_flat = pl.pallas_call(
        kernel,
        out_shape=jax.ShapeDtypeStruct((N, OC_pad, Lo_pad), x.dtype),
        grid_spec=pltpu.PrefetchScalarGridSpec(
            num_scalar_prefetch=0,
            grid=(N,),                                               # one image per step
            in_specs=[
                pl.BlockSpec((None, C_pad, L), lambda n: (n, 0, 0)),   # image (flat)
                pl.BlockSpec((OC_pad, K), lambda n: (0, 0)),           # fused weight (resident)
                pl.BlockSpec((OC_pad, 1), lambda n: (0, 0)),           # bias (resident)
            ],
            out_specs=pl.BlockSpec((None, OC_pad, Lo_pad), lambda n: (n, 0, 0)),
            scratch_shapes=[pltpu.VMEM((K, Lo_pad), cdtype)],
        ),
        compiler_params=pltpu.CompilerParams(
            dimension_semantics=("parallel",),
            vmem_limit_bytes=vmem_limit),
    )(xf, w_fused, b_t)

    # Drop padded OC rows / tail lanes, unflatten -> NCHW (no transpose needed).
    # A fused consumer could skip this crop and take the padded layout directly.
    out = out_flat[:, :OC, :Lo].reshape(N, OC, H_out, Wp)[:, :, :, :W_out]
    return out


if __name__ == "__main__":
    key = jax.random.PRNGKey(0)
    kx, kw = jax.random.split(key)

    # EqualConv2d(in_channels=4, out_channels=8, kernel_size=3, padding=1)
    N, C, H, W = 2, 4, 16, 16
    OC, KH, KW = 8, 3, 3
    pad = 1

    x = jax.random.normal(kx, (N, C, H, W), dtype=jnp.float32)
    weight_orig = jax.random.normal(kw, (OC, C, KH, KW), dtype=jnp.float32)  # .normal_()
    bias = jnp.zeros((OC,), dtype=jnp.float32)                               # .zero_()
    gain = 1.0

    y = equal_conv2d(x, weight_orig, bias, gain=gain, padding=pad)
    y = jax.block_until_ready(y)

    # Reference: plain JAX conv with the equalized-LR scaled weight.
    w_scaled = weight_orig * math.sqrt(2.0 / (C * KH * KW)) * gain
    y_ref = jax.lax.conv_general_dilated(
        x, w_scaled, window_strides=(1, 1), padding=((pad, pad), (pad, pad)),
        dimension_numbers=("NCHW", "OIHW", "NCHW"),
        precision=jax.lax.Precision.HIGHEST) + bias.reshape(1, OC, 1, 1)

    assert y.shape == (N, OC, H, W)
    assert jnp.allclose(y, y_ref, atol=1e-3, rtol=1e-3), float(jnp.max(jnp.abs(y - y_ref)))
    print("KERNEL_OK")
</pallas_src>

<mosaic_0001>
module attributes {stable_mosaic.version = 11 : i64} {
  func.func @_equal_conv2d_kernel(%arg0: i32, %arg1: memref<1x8x432xf32, #tpu.memory_space<vmem>>, %arg2: memref<8x72xf32, #tpu.memory_space<vmem>>, %arg3: memref<8x1xf32, #tpu.memory_space<vmem>>, %arg4: memref<1x8x384xf32, #tpu.memory_space<vmem>>, %arg5: memref<72x384xf32, #tpu.memory_space<vmem>>) attributes {dimension_semantics = [#tpu.dimension_semantics<parallel>], iteration_bounds = array<i64: 2>, scalar_prefetch = 0 : i64, scratch_operands = 1 : i64, tpu.core_type = #tpu.core_type<tc>, window_params = [{transform_indices = @transform_0, window_bounds = array<i64: 1, 8, 432>}, {pipeline_mode = #tpu.pipeline_mode<synchronous>, transform_indices = @transform_1, window_bounds = array<i64: 8, 72>}, {pipeline_mode = #tpu.pipeline_mode<synchronous>, transform_indices = @transform_2, window_bounds = array<i64: 8, 1>}, {transform_indices = @transform_3, window_bounds = array<i64: 1, 8, 384>}]} {
    %c0 = arith.constant 0 : index
    %c0_0 = arith.constant 0 : index
    %c0_1 = arith.constant 0 : index
    %0 = vector.load %arg1[%c0, %c0_0, %c0_1] : memref<1x8x432xf32, #tpu.memory_space<vmem>>, vector<1x8x432xf32>
    %1 = vector.shape_cast %0 : vector<1x8x432xf32> to vector<8x432xf32>
    %2 = vector.extract_strided_slice %1 {offsets = [0, 0], sizes = [8, 384], strides = [1, 1]} : vector<8x432xf32> to vector<8x384xf32>
    %c0_2 = arith.constant 0 : index
    %c0_3 = arith.constant 0 : index
    %3 = vector.load %arg5[%c0_2, %c0_3] : memref<72x384xf32, #tpu.memory_space<vmem>>, vector<8x384xf32>
    tpu.vector_store %arg5[%c0_2, %c0_3], %2 {strides = array<i32>} : memref<72x384xf32, #tpu.memory_space<vmem>>, vector<8x384xf32>,
    %4 = vector.extract_strided_slice %1 {offsets = [0, 1], sizes = [8, 384], strides = [1, 1]} : vector<8x432xf32> to vector<8x384xf32>
    %c8 = arith.constant 8 : index
    %c0_4 = arith.constant 0 : index
    %5 = vector.load %arg5[%c8, %c0_4] : memref<72x384xf32, #tpu.memory_space<vmem>>, vector<8x384xf32>
    tpu.vector_store %arg5[%c8, %c0_4], %4 {strides = array<i32>} : memref<72x384xf32, #tpu.memory_space<vmem>>, vector<8x384xf32>,
    %6 = vector.extract_strided_slice %1 {offsets = [0, 2], sizes = [8, 384], strides = [1, 1]} : vector<8x432xf32> to vector<8x384xf32>
    %c16 = arith.constant 16 : index
    %c0_5 = arith.constant 0 : index
    %7 = vector.load %arg5[%c16, %c0_5] : memref<72x384xf32, #tpu.memory_space<vmem>>, vector<8x384xf32>
    tpu.vector_store %arg5[%c16, %c0_5], %6 {strides = array<i32>} : memref<72x384xf32, #tpu.memory_space<vmem>>, vector<8x384xf32>,
    %8 = vector.extract_strided_slice %1 {offsets = [0, 18], sizes = [8, 384], strides = [1, 1]} : vector<8x432xf32> to vector<8x384xf32>
    %c24 = arith.constant 24 : index
    %c0_6 = arith.constant 0 : index
    %9 = vector.load %arg5[%c24, %c0_6] : memref<72x384xf32, #tpu.memory_space<vmem>>, vector<8x384xf32>
    tpu.vector_store %arg5[%c24, %c0_6], %8 {strides = array<i32>} : memref<72x384xf32, #tpu.memory_space<vmem>>, vector<8x384xf32>,
    %10 = vector.extract_strided_slice %1 {offsets = [0, 19], sizes = [8, 384], strides = [1, 1]} : vector<8x432xf32> to vector<8x384xf32>
    %c32 = arith.constant 32 : index
    %c0_7 = arith.constant 0 : index
    %11 = vector.load %arg5[%c32, %c0_7] : memref<72x384xf32, #tpu.memory_space<vmem>>, vector<8x384xf32>
    tpu.vector_store %arg5[%c32, %c0_7], %10 {strides = array<i32>} : memref<72x384xf32, #tpu.memory_space<vmem>>, vector<8x384xf32>,
    %12 = vector.extract_strided_slice %1 {offsets = [0, 20], sizes = [8, 384], strides = [1, 1]} : vector<8x432xf32> to vector<8x384xf32>
    %c40 = arith.constant 40 : index
    %c0_8 = arith.constant 0 : index
    %13 = vector.load %arg5[%c40, %c0_8] : memref<72x384xf32, #tpu.memory_space<vmem>>, vector<8x384xf32>
    tpu.vector_store %arg5[%c40, %c0_8], %12 {strides = array<i32>} : memref<72x384xf32, #tpu.memory_space<vmem>>, vector<8x384xf32>,
    %14 = vector.extract_strided_slice %1 {offsets = [0, 36], sizes = [8, 384], strides = [1, 1]} : vector<8x432xf32> to vector<8x384xf32>
    %c48 = arith.constant 48 : index
    %c0_9 = arith.constant 0 : index
    %15 = vector.load %arg5[%c48, %c0_9] : memref<72x384xf32, #tpu.memory_space<vmem>>, vector<8x384xf32>
    tpu.vector_store %arg5[%c48, %c0_9], %14 {strides = array<i32>} : memref<72x384xf32, #tpu.memory_space<vmem>>, vector<8x384xf32>,
    %16 = vector.extract_strided_slice %1 {offsets = [0, 37], sizes = [8, 384], strides = [1, 1]} : vector<8x432xf32> to vector<8x384xf32>
    %c56 = arith.constant 56 : index
    %c0_10 = arith.constant 0 : index
    %17 = vector.load %arg5[%c56, %c0_10] : memref<72x384xf32, #tpu.memory_space<vmem>>, vector<8x384xf32>
    tpu.vector_store %arg5[%c56, %c0_10], %16 {strides = array<i32>} : memref<72x384xf32, #tpu.memory_space<vmem>>, vector<8x384xf32>,
    %18 = vector.extract_strided_slice %1 {offsets = [0, 38], sizes = [8, 384], strides = [1, 1]} : vector<8x432xf32> to vector<8x384xf32>
    %c64 = arith.constant 64 : index
    %c0_11 = arith.constant 0 : index
    %19 = vector.load %arg5[%c64, %c0_11] : memref<72x384xf32, #tpu.memory_space<vmem>>, vector<8x384xf32>
    tpu.vector_store %arg5[%c64, %c0_11], %18 {strides = array<i32>} : memref<72x384xf32, #tpu.memory_space<vmem>>, vector<8x384xf32>,
    %c0_12 = arith.constant 0 : index
    %c0_13 = arith.constant 0 : index
    %20 = vector.load %arg2[%c0_12, %c0_13] : memref<8x72xf32, #tpu.memory_space<vmem>>, vector<8x72xf32>
    %c0_14 = arith.constant 0 : index
    %c0_15 = arith.constant 0 : index
    %21 = vector.load %arg5[%c0_14, %c0_15] : memref<72x384xf32, #tpu.memory_space<vmem>>, vector<72x384xf32>
    %cst = arith.constant dense<0.000000e+00> : vector<8x384xf32>
    %22 = tpu.matmul %20, %21, %cst {dimension_numbers = #tpu.dot_dimension_numbers<[1], [0], [0], [1], [0, 0, 1, 1], [], []>} : vector<8x72xf32>, vector<72x384xf32>, vector<8x384xf32> -> vector<8x384xf32>
    %c0_16 = arith.constant 0 : index
    %c0_17 = arith.constant 0 : index
    %23 = vector.load %arg3[%c0_16, %c0_17] : memref<8x1xf32, #tpu.memory_space<vmem>>, vector<8x1xf32>
    %24 = vector.broadcast %23 : vector<8x1xf32> to vector<8x384xf32>
    %25 = arith.addf %22, %24 : vector<8x384xf32>
    %c0_18 = arith.constant 0 : index
    %c0_19 = arith.constant 0 : index
    %c0_20 = arith.constant 0 : index
    %26 = vector.load %arg4[%c0_18, %c0_19, %c0_20] : memref<1x8x384xf32, #tpu.memory_space<vmem>>, vector<1x8x384xf32>
    %27 = vector.shape_cast %26 : vector<1x8x384xf32> to vector<8x384xf32>
    %28 = vector.shape_cast %25 : vector<8x384xf32> to vector<1x8x384xf32>
    tpu.vector_store %arg4[%c0_18, %c0_19, %c0_20], %28 {strides = array<i32>} : memref<1x8x384xf32, #tpu.memory_space<vmem>>, vector<1x8x384xf32>,
    return
  }
  func.func @transform_0(%arg0: i32) -> (i32, i32, i32) {
    %c0_i32 = arith.constant 0 : i32
    %c0_i32_0 = arith.constant 0 : i32
    %c0_i32_1 = arith.constant 0 : i32
    return %arg0, %c0_i32, %c0_i32_0 : i32, i32, i32
  }
  func.func @transform_1(%arg0: i32) -> (i32, i32) {
    %c0_i32 = arith.constant 0 : i32
    %c0_i32_0 = arith.constant 0 : i32
    %c0_i32_1 = arith.constant 0 : i32
    return %c0_i32, %c0_i32_0 : i32, i32
  }
  func.func @transform_2(%arg0: i32) -> (i32, i32) {
    %c0_i32 = arith.constant 0 : i32
    %c0_i32_0 = arith.constant 0 : i32
    %c0_i32_1 = arith.constant 0 : i32
    return %c0_i32, %c0_i32_0 : i32, i32
  }
  func.func @transform_3(%arg0: i32) -> (i32, i32, i32) {
    %c0_i32 = arith.constant 0 : i32
    %c0_i32_0 = arith.constant 0 : i32
    %c0_i32_1 = arith.constant 0 : i32
    return %arg0, %c0_i32, %c0_i32_0 : i32, i32, i32
  }
}

</mosaic_0001>

<llo_original>
// kernel: tpu_custom_call.1
$region0: #{tpu_custom_call.1}
  #allocation0 [shape = 'u32[]', space=smem, size = 0x4, offset = 0x4, fixed_abs, tag = 'smem constant byte address 0x4 - core index']
  #allocation1 [shape = 'u32[144,128]{1,0:T(1,128)}', space=vmem, size = 0x12000, scoped, tag = 'internal scratch']
  #allocation2 [shape = 'f32[72,384]{1,0:T(8,128)}', space=vmem, size = 0x1b000, scoped, tag = 'scratch operand']
  %s0 = inlined_call_operand.hbm [shape: f32[2,8,432], index: 0, kind: input, shape index: {}]
  %s1 = inlined_call_operand.vmem [shape: f32[8,72], index: 1, kind: input, shape index: {}]
  %s2 = inlined_call_operand.vmem [shape: f32[8,1], index: 2, kind: input, shape index: {}]
  %s3 = inlined_call_operand.hbm [shape: f32[2,8,384], index: 3, kind: output, shape index: {}]
  %s4 = sld [smem:[#allocation0]]
  $region49: #{tpu_custom_call.1} parent=0
    _
  %s6 = ssub.s32 1, %s4
  %s7 = scalar_select 0, %s6, %s4
  $region1: #{tpu_custom_call.1} parent=0
    #allocation3 [shape = 'u8[32768]{0}', space=vmem, size = 0x8000, scoped, tag = 'input window, operand 0']
    #allocation4 [shape = 's32[2]{0}', space=sflag, size = 0x8, scoped, tag = 'scoped memory for tpu_custom_call.1']
    #allocation5 [shape = 's32[2]{0}', space=sflag, size = 0x8, scoped, tag = 'scoped memory for tpu_custom_call.1']
    #allocation6 [shape = 'u8[24576]{0}', space=vmem, size = 0x6000, scoped, tag = 'output window, operand 0']
    %8 = vsyncpa [#allocation4], 0
    %s9 = scalar_lea.sflag [#allocation4], 1
    %10 = vsyncpa %s9, 0
    %11 = vsyncpa [#allocation5], 0
    %s12 = scalar_lea.sflag [#allocation5], 1
    %13 = vsyncpa %s12, 0
    loop: start=0, step=1, limit=4
    $region2: #{tpu_custom_call.1} parent=1 // loop_pre_header
      _
    $region3: #{tpu_custom_call.1} parent=1 // loop_header
      %s15 = sphi 0, %s19
      %p16 = scmp.ge.s32.totalorder %s15, 4
      %s25 = sphi 0, %s27
      %s28 = sphi 0, %s25
      %s29 = sphi 0, %s28
      %s45 = sphi 0, %s29
      %s49 = sphi 0, %s49
      %s51 = sphi 0, %s49
      %s52 = sphi 0, %s51
      %s66 = sphi 0, %s52
      %s70 = sphi 0, %s70
      %s72 = sphi 0, %s70
      %s73 = sphi 0, %s72
      %s87 = sphi 0, %s73
      %s93 = sphi 0, %s95
      %s96 = sphi 0, %s93
      %s97 = sphi 0, %s96
      %s113 = sphi 0, %s97
    $region4: #{tpu_custom_call.1} parent=1 // loop_header_branch
      %18 = sbr.rel (%p16) target = $region8
    $region5: #{tpu_custom_call.1} parent=1 // loop_body
      %s20 = ssub.s32 %s15, 1
      %s21 = ssub.s32 %s15, 2
      %s22 = sadd.s32 %s15, 1
      %s23 = ssub.s32 %s15, %s22
      %p24 = scmp.eq.s32.totalorder %s23, 0
      %s26 = sadd.s32 %s25, 1
      %s27 = scalar_select %p24, %s25, %s26
      %p30 = pneg %p24
      %p31 = scmp.eq.s32.totalorder %s15, 1
      %p32 = por %p30, %p31
      %p33 = scmp.ne.s32.totalorder %s25, %s28
      %p34 = scmp.eq.s32.totalorder %s15, 0
      %p35 = por %p33, %p34
      %p36 = scmp.ne.s32.totalorder %s25, %s28
      %p37 = scmp.eq.s32.totalorder %s20, 1
      %p38 = por %p36, %p37
      %p39 = scmp.ne.s32.totalorder %s28, %s29
      %p40 = scmp.eq.s32.totalorder %s20, 0
      %p41 = por %p39, %p40
      %p42 = scmp.ne.s32.totalorder %s28, %s29
      %p43 = scmp.eq.s32.totalorder %s21, 1
      %p44 = por %p42, %p43
      %p46 = scmp.ne.s32.totalorder %s29, %s45
      %p47 = scmp.eq.s32.totalorder %s21, 0
      %p48 = por %p46, %p47
      %s50 = sadd.s32 %s49, 1
      %p53 = scmp.eq.s32.totalorder %s15, 1
      %p54 = scmp.ne.s32.totalorder %s49, %s51
      %p55 = scmp.eq.s32.totalorder %s15, 0
      %p56 = por %p54, %p55
      %p57 = scmp.ne.s32.totalorder %s49, %s51
      %p58 = scmp.eq.s32.totalorder %s20, 1
      %p59 = por %p57, %p58
      %p60 = scmp.ne.s32.totalorder %s51, %s52
      %p61 = scmp.eq.s32.totalorder %s20, 0
      %p62 = por %p60, %p61
      %p63 = scmp.ne.s32.totalorder %s51, %s52
      %p64 = scmp.eq.s32.totalorder %s21, 1
      %p65 = por %p63, %p64
      %p67 = scmp.ne.s32.totalorder %s52, %s66
      %p68 = scmp.eq.s32.totalorder %s21, 0
      %p69 = por %p67, %p68
      %s71 = sadd.s32 %s70, 1
      %p74 = scmp.eq.s32.totalorder %s15, 1
      %p75 = scmp.ne.s32.totalorder %s70, %s72
      %p76 = scmp.eq.s32.totalorder %s15, 0
      %p77 = por %p75, %p76
      %p78 = scmp.ne.s32.totalorder %s70, %s72
      %p79 = scmp.eq.s32.totalorder %s20, 1
      %p80 = por %p78, %p79
      %p81 = scmp.ne.s32.totalorder %s72, %s73
      %p82 = scmp.eq.s32.totalorder %s20, 0
      %p83 = por %p81, %p82
      %p84 = scmp.ne.s32.totalorder %s72, %s73
      %p85 = scmp.eq.s32.totalorder %s21, 1
      %p86 = por %p84, %p85
      %p88 = scmp.ne.s32.totalorder %s73, %s87
      %p89 = scmp.eq.s32.totalorder %s21, 0
      %p90 = por %p88, %p89
      %s91 = ssub.s32 %s15, %s22
      %p92 = scmp.eq.s32.totalorder %s91, 0
      %s94 = sadd.s32 %s93, 1
      %s95 = scalar_select %p92, %s93, %s94
      %p98 = pneg %p92
      %p99 = scmp.eq.s32.totalorder %s15, 1
      %p100 = por %p98, %p99
      %p101 = scmp.ne.s32.totalorder %s93, %s96
      %p102 = scmp.eq.s32.totalorder %s15, 0
      %p103 = por %p101, %p102
      %p104 = scmp.ne.s32.totalorder %s93, %s96
      %p105 = scmp.eq.s32.totalorder %s20, 1
      %p106 = por %p104, %p105
      %p107 = scmp.ne.s32.totalorder %s96, %s97
      %p108 = scmp.eq.s32.totalorder %s20, 0
      %p109 = por %p107, %p108
      %p110 = scmp.ne.s32.totalorder %s96, %s97
      %p111 = scmp.eq.s32.totalorder %s21, 1
      %p112 = por %p110, %p111
      %p114 = scmp.ne.s32.totalorder %s97, %s113
      %p115 = scmp.eq.s32.totalorder %s21, 0
      %p116 = por %p114, %p115
      %p117 = scmp.le.s32.totalorder 1, %s15
      %p118 = scmp.lt.s32.totalorder %s15, 3
      %p119 = pnand %p117, %p118
      %p120 = pneg %p119
      // Predicated region
      $region9: #{tpu_custom_call.1} parent=5 // pred_check
        _
      $region10: #{tpu_custom_call.1} parent=5 // pred_check_branch
        %122 = sbr.rel (%p119) target = $region12
      $region11: #{tpu_custom_call.1} parent=5 // pred_region
        %s123 = ssub.s32 %s15, 1
        // Predicated region
        $region13: #{tpu_custom_call.1} parent=11 // pred_check
          %p124 = pneg %p62
        $region14: #{tpu_custom_call.1} parent=11 // pred_check_branch
          %126 = sbr.rel (%p124) target = $region16
        $region15: #{tpu_custom_call.1} parent=11 // pred_region
          _
        $region16: #{tpu_custom_call.1} parent=11 // pred_fallthru
          _
        // Predicated region
        $region17: #{tpu_custom_call.1} parent=11 // pred_check
          %p127 = pneg %p83
        $region18: #{tpu_custom_call.1} parent=11 // pred_check_branch
          %129 = sbr.rel (%p127) target = $region20
        $region19: #{tpu_custom_call.1} parent=11 // pred_region
          _
        $region20: #{tpu_custom_call.1} parent=11 // pred_fallthru
          _
      $region12: #{tpu_custom_call.1} parent=5 // pred_fallthru
        _
      %p130 = scmp.lt.s32.totalorder %s15, 2
      // Predicated region
      $region21: #{tpu_custom_call.1} parent=5 // pred_check
        %p131 = pneg %p130
      $region22: #{tpu_custom_call.1} parent=5 // pred_check_branch
        %133 = sbr.rel (%p131) target = $region24
      $region23: #{tpu_custom_call.1} parent=5 // pred_region
        // Predicated region
        $region25: #{tpu_custom_call.1} parent=23 // pred_check
          %p134 = pneg %p35
        $region26: #{tpu_custom_call.1} parent=23 // pred_check_branch
          %136 = sbr.rel (%p134) target = $region28
        $region27: #{tpu_custom_call.1} parent=23 // pred_region
          %s137 = sand.u32 %s25, 1
          %s138 = scalar_lea.sflag [#allocation4], %s137
          %s139 = sand.u32 %s25, 1
          %s140 = smul.addr %s139, 32
          %s141 = scalar_lea.vmem [#allocation3], %s140
          %s143 = ssub.s32 512, 512
          %144 = vsyncadd %s138, %s143
          %s145 = smul.addr %s15, 4
          %s146 = smul.addr %s145, 128
          %s147 = scalar_lea.hbm %s0, %s146
          %s149 = sshll.u32 %s141, 4
          %s150 = int_to_ptr.vmem [resolvable:$true] %s149
          %152 = dma.hbm_to_vmem [thread:$0]  %s147, 512, %s150, %s138
        $region28: #{tpu_custom_call.1} parent=23 // pred_fallthru
          _
      $region24: #{tpu_custom_call.1} parent=5 // pred_fallthru
        _
      %p153 = scmp.le.s32.totalorder 1, %s15
      %p154 = scmp.lt.s32.totalorder %s15, 3
      %p155 = pnand %p153, %p154
      %p156 = pneg %p155
      // Predicated region
      $region29: #{tpu_custom_call.1} parent=5 // pred_check
        _
      $region30: #{tpu_custom_call.1} parent=5 // pred_check_branch
        %158 = sbr.rel (%p155) target = $region32
      $region31: #{tpu_custom_call.1} parent=5 // pred_region
        %s159 = ssub.s32 %s15, 1
        %s160 = sand.u32 %s28, 1
        %s161 = scalar_lea.sflag [#allocation4], %s160
        %s162 = sand.u32 %s28, 1
        %s163 = smul.addr %s162, 32
        %s164 = scalar_lea.vmem [#allocation3], %s163
        // Predicated region
        $region33: #{tpu_custom_call.1} parent=31 // pred_check
          %p165 = pneg %p41
        $region34: #{tpu_custom_call.1} parent=31 // pred_check_branch
          %167 = sbr.rel (%p165) target = $region36
        $region35: #{tpu_custom_call.1} parent=31 // pred_region
          %168 = dma.done %s161, 512
        $region36: #{tpu_custom_call.1} parent=31 // pred_fallthru
          _
        %s169 = sand.u32 %s28, 1
        %s170 = scalar_lea.sflag [#allocation4], %s169
        %s171 = sand.u32 %s28, 1
        %s172 = smul.addr %s171, 32
        %s173 = scalar_lea.vmem [#allocation3], %s172
        %p174 = pneg %p41
        %p175 = pneg %p38
        %p176 = pneg %p62
        %p177 = pneg %p59
        %p178 = pneg %p83
        %p179 = pneg %p80
        %p180 = pneg %p109
        %p181 = pneg %p106
        %s182 = sand.u32 %s96, 1
        %s183 = scalar_lea.sflag [#allocation5], %s182
        %s184 = sand.u32 %s96, 1
        %s185 = smul.addr %s184, 24
        %s186 = scalar_lea.vmem [#allocation6], %s185
        %v187 = vld [vmem:[%s164] sm:$0xff]
        %v188 = vld [vmem:[%s164 + $0x8] sm:$0xff]
        %v189 = vld [vmem:[%s164 + $0x10] sm:$0xff]
        %v190 = vld [vmem:[%s164 + $0x18] sm:$0xff]
        %191 = vst [vmem:[#allocation2] sm:$0xff] %v187
        %192 = vst [vmem:[#allocation2 + $0x8] sm:$0xff] %v188
        %193 = vst [vmem:[#allocation2 + $0x10] sm:$0xff] %v189
        %198 = vrot.lane.b32.xlu0 %v187, 127
        %v199 = vpop.permute.xlu0 %198
        %200 = vrot.lane.b32.xlu0 %v188, 127
        %v201 = vpop.permute.xlu0 %200
        %202 = vrot.lane.b32.xlu0 %v189, 127
        %v203 = vpop.permute.xlu0 %202
        %204 = vrot.lane.b32.xlu0 %v190, 127
        %v205 = vpop.permute.xlu0 %204
        %vm206 = vcmask 1039360
        %v207 = vsel %vm206, %v199, %v201
        %v208 = vsel %vm206, %v201, %v203
        %v209 = vsel %vm206, %v203, %v205
        %213 = vst [vmem:[#allocation2 + $0x18] sm:$0xff] %v207
        %214 = vst [vmem:[#allocation2 + $0x20] sm:$0xff] %v208
        %215 = vst [vmem:[#allocation2 + $0x28] sm:$0xff] %v209
        %216 = vrot.lane.b32.xlu0 %v187, 126
        %v217 = vpop.permute.xlu0 %216
        %218 = vrot.lane.b32.xlu0 %v188, 126
        %v219 = vpop.permute.xlu0 %218
        %220 = vrot.lane.b32.xlu0 %v189, 126
        %v221 = vpop.permute.xlu0 %220
        %222 = vrot.lane.b32.xlu0 %v190, 126
        %v223 = vpop.permute.xlu0 %222
        %vm224 = vcmask 1031168
        %v225 = vsel %vm224, %v217, %v219
        %v226 = vsel %vm224, %v219, %v221
        %v227 = vsel %vm224, %v221, %v223
        %231 = vst [vmem:[#allocation2 + $0x30] sm:$0xff] %v225
        %232 = vst [vmem:[#allocation2 + $0x38] sm:$0xff] %v226
        %233 = vst [vmem:[#allocation2 + $0x40] sm:$0xff] %v227
        %234 = vrot.lane.b32.xlu0 %v187, 110
        %v235 = vpop.permute.xlu0 %234
        %236 = vrot.lane.b32.xlu0 %v188, 110
        %v237 = vpop.permute.xlu0 %236
        %238 = vrot.lane.b32.xlu0 %v189, 110
        %v239 = vpop.permute.xlu0 %238
        %240 = vrot.lane.b32.xlu0 %v190, 110
        %v241 = vpop.permute.xlu0 %240
        %vm242 = vcmask 900096
        %v243 = vsel %vm242, %v235, %v237
        %v244 = vsel %vm242, %v237, %v239
        %v245 = vsel %vm242, %v239, %v241
        %249 = vst [vmem:[#allocation2 + $0x48] sm:$0xff] %v243
        %250 = vst [vmem:[#allocation2 + $0x50] sm:$0xff] %v244
        %251 = vst [vmem:[#allocation2 + $0x58] sm:$0xff] %v245
        %252 = vrot.lane.b32.xlu0 %v187, 109
        %v253 = vpop.permute.xlu0 %252
        %254 = vrot.lane.b32.xlu0 %v188, 109
        %v255 = vpop.permute.xlu0 %254
        %256 = vrot.lane.b32.xlu0 %v189, 109
        %v257 = vpop.permute.xlu0 %256
        %258 = vrot.lane.b32.xlu0 %v190, 109
        %v259 = vpop.permute.xlu0 %258
        %vm260 = vcmask 891904
        %v261 = vsel %vm260, %v253, %v255
        %v262 = vsel %vm260, %v255, %v257
        %v263 = vsel %vm260, %v257, %v259
        %267 = vst [vmem:[#allocation2 + $0x60] sm:$0xff] %v261
        %268 = vst [vmem:[#allocation2 + $0x68] sm:$0xff] %v262
        %269 = vst [vmem:[#allocation2 + $0x70] sm:$0xff] %v263
        %270 = vrot.lane.b32.xlu0 %v187, 108
        %v271 = vpop.permute.xlu0 %270
        %272 = vrot.lane.b32.xlu0 %v188, 108
        %v273 = vpop.permute.xlu0 %272
        %274 = vrot.lane.b32.xlu0 %v189, 108
        %v275 = vpop.permute.xlu0 %274
        %276 = vrot.lane.b32.xlu0 %v190, 108
        %v277 = vpop.permute.xlu0 %276
        %vm278 = vcmask 883712
        %v279 = vsel %vm278, %v271, %v273
        %v280 = vsel %vm278, %v273, %v275
        %v281 = vsel %vm278, %v275, %v277
        %285 = vst [vmem:[#allocation2 + $0x78] sm:$0xff] %v279
        %286 = vst [vmem:[#allocation2 + $0x80] sm:$0xff] %v280
        %287 = vst [vmem:[#allocation2 + $0x88] sm:$0xff] %v281
        %288 = vrot.lane.b32.xlu0 %v187, 92
        %v289 = vpop.permute.xlu0 %288
        %290 = vrot.lane.b32.xlu0 %v188, 92
        %v291 = vpop.permute.xlu0 %290
        %292 = vrot.lane.b32.xlu0 %v189, 92
        %v293 = vpop.permute.xlu0 %292
        %294 = vrot.lane.b32.xlu0 %v190, 92
        %v295 = vpop.permute.xlu0 %294
        %vm296 = vcmask 752640
        %v297 = vsel %vm296, %v289, %v291
        %v298 = vsel %vm296, %v291, %v293
        %v299 = vsel %vm296, %v293, %v295
        %303 = vst [vmem:[#allocation2 + $0x90] sm:$0xff] %v297
        %304 = vst [vmem:[#allocation2 + $0x98] sm:$0xff] %v298
        %305 = vst [vmem:[#allocation2 + $0xa0] sm:$0xff] %v299
        %306 = vrot.lane.b32.xlu0 %v187, 91
        %v307 = vpop.permute.xlu0 %306
        %308 = vrot.lane.b32.xlu0 %v188, 91
        %v309 = vpop.permute.xlu0 %308
        %310 = vrot.lane.b32.xlu0 %v189, 91
        %v311 = vpop.permute.xlu0 %310
        %312 = vrot.lane.b32.xlu0 %v190, 91
        %v313 = vpop.permute.xlu0 %312
        %vm314 = vcmask 744448
        %v315 = vsel %vm314, %v307, %v309
        %v316 = vsel %vm314, %v309, %v311
        %v317 = vsel %vm314, %v311, %v313
        %321 = vst [vmem:[#allocation2 + $0xa8] sm:$0xff] %v315
        %322 = vst [vmem:[#allocation2 + $0xb0] sm:$0xff] %v316
        %323 = vst [vmem:[#allocation2 + $0xb8] sm:$0xff] %v317
        %324 = vrot.lane.b32.xlu0 %v187, 90
        %v325 = vpop.permute.xlu0 %324
        %326 = vrot.lane.b32.xlu0 %v188, 90
        %v327 = vpop.permute.xlu0 %326
        %328 = vrot.lane.b32.xlu0 %v189, 90
        %v329 = vpop.permute.xlu0 %328
        %330 = vrot.lane.b32.xlu0 %v190, 90
        %v331 = vpop.permute.xlu0 %330
        %vm332 = vcmask 736256
        %v333 = vsel %vm332, %v325, %v327
        %v334 = vsel %vm332, %v327, %v329
        %v335 = vsel %vm332, %v329, %v331
        %339 = vst [vmem:[#allocation2 + $0xc0] sm:$0xff] %v333
        %340 = vst [vmem:[#allocation2 + $0xc8] sm:$0xff] %v334
        %341 = vst [vmem:[#allocation2 + $0xd0] sm:$0xff] %v335
        %v342 = vld [vmem:[%s1] sm:$0xff]
        %v343 = vld [vmem:[#allocation2] sm:$0xff]
        %v344 = vld [vmem:[#allocation2 + $0x8] sm:$0xff]
        %v345 = vld [vmem:[#allocation2 + $0x10] sm:$0xff]
        %v346 = vld [vmem:[#allocation2 + $0x18] sm:$0xff]
        %v347 = vld [vmem:[#allocation2 + $0x20] sm:$0xff]
        %v348 = vld [vmem:[#allocation2 + $0x28] sm:$0xff]
        %v349 = vld [vmem:[#allocation2 + $0x30] sm:$0xff]
        %v350 = vld [vmem:[#allocation2 + $0x38] sm:$0xff]
        %v351 = vld [vmem:[#allocation2 + $0x40] sm:$0xff]
        %v352 = vld [vmem:[#allocation2 + $0x48] sm:$0xff]
        %v353 = vld [vmem:[#allocation2 + $0x50] sm:$0xff]
        %v354 = vld [vmem:[#allocation2 + $0x58] sm:$0xff]
        %v355 = vld [vmem:[#allocation2 + $0x60] sm:$0xff]
        %v356 = vld [vmem:[#allocation2 + $0x68] sm:$0xff]
        %v357 = vld [vmem:[#allocation2 + $0x70] sm:$0xff]
        %v358 = vld [vmem:[#allocation2 + $0x78] sm:$0xff]
        %v359 = vld [vmem:[#allocation2 + $0x80] sm:$0xff]
        %v360 = vld [vmem:[#allocation2 + $0x88] sm:$0xff]
        %v361 = vld [vmem:[#allocation2 + $0x90] sm:$0xff]
        %v362 = vld [vmem:[#allocation2 + $0x98] sm:$0xff]
        %v363 = vld [vmem:[#allocation2 + $0xa0] sm:$0xff]
        %v364 = vld [vmem:[#allocation2 + $0xa8] sm:$0xff]
        %v365 = vld [vmem:[#allocation2 + $0xb0] sm:$0xff]
        %v366 = vld [vmem:[#allocation2 + $0xb8] sm:$0xff]
        %v367 = vld [vmem:[#allocation2 + $0xc0] sm:$0xff]
        %v368 = vld [vmem:[#allocation2 + $0xc8] sm:$0xff]
        %v369 = vld [vmem:[#allocation2 + $0xd0] sm:$0xff]
        %v370 = vld [vmem:[%s2] sm:$0xff]
        %372 = vset.pattern.permute.xlu0 0
        %373 = vperm.xlu0 %372, %v370
        %v374 = vpop.permute.xlu0 %373
        %vm376 = vcmask 588800
        %v378 = vsel %vm376, %v342, 0
        %380 = vmatprep.subr.mxu0 %v344
        %381 = vmatpush1.msra.mxu0 %v343
        %382 = vmatprep.subr.mxu0 %v347
        %383 = vmatpush1.msra.mxu0 %v346
        %384 = vmatprep.subr.mxu0 %v350
        %385 = vmatpush1.msra.mxu0 %v349
        %386 = vmatprep.subr.mxu0 %v353
        %387 = vmatpush1.msra.mxu0 %v352
        %388 = vmatprep.subr.mxu0 %v356
        %389 = vmatpush1.msra.mxu0 %v355
        %390 = vmatprep.subr.mxu0 %v359
        %391 = vmatpush1.msra.mxu0 %v358
        %392 = vmatprep.subr.mxu0 %v362
        %393 = vmatpush1.msra.mxu0 %v361
        %394 = vmatprep.subr.mxu0 %v365
        %395 = vmatpush1.msra.mxu0 %v364
        %396 = vmatprep.subr.mxu0 %v368
        %397 = vmatpush1.msra.mxu0 %v367
        %398 = vmatprep.subr.mxu0 0.0
        %399 = vmatpush1.msra.mxu0 0.0
        %400 = vmatprep.subr.mxu0 0.0
        %401 = vmatpush1.msra.mxu0 0.0
        %402 = vmatprep.subr.mxu0 0.0
        %403 = vmatpush1.msra.mxu0 0.0
        %404 = vmatprep.subr.mxu0 0.0
        %405 = vmatpush1.msra.mxu0 0.0
        %406 = vmatprep.subr.mxu0 0.0
        %407 = vmatpush1.msra.mxu0 0.0
        %408 = vmatprep.subr.mxu0 0.0
        %409 = vmatpush1.msra.mxu0 0.0
        %410 = vmatprep.subr.mxu0 0.0
        %411 = vmatpush1.msra.mxu0 0.0
        %412 = vmatprep.subr.mxu0 0.0
        %413 = vmatpush1.msra.mxu0 0.0
        %414 = vmatprep.subr.mxu0 0.0
        %415 = vmatpush1.msra.mxu0 0.0
        %416 = vmatprep.subr.mxu0 0.0
        %417 = vmatpush1.msra.mxu0 0.0
        %418 = vmatprep.subr.mxu0 0.0
        %419 = vmatpush1.msra.mxu0 0.0
        %420 = vmatprep.subr.mxu0 0.0
        %421 = vmatpush1.msra.mxu0 0.0
        %422 = vmatprep.subr.mxu0 0.0
        %423 = vmatpush1.msra.mxu0 0.0
        %424 = vmatprep.subr.mxu0 0.0
        %425 = vmatpush1.msra.mxu0 0.0
        %426 = vmatprep.subr.mxu0 0.0
        %427 = vmatpush1.msra.mxu0 0.0
        %428 = vmatprep.subr.mxu0 0.0
        %429 = vmatpush1.msra.mxu0 0.0
        %430 = vmatprep.subr.mxu0 0.0
        %431 = vmatpush1.msra.mxu0 0.0
        %432 = vmatprep.subr.mxu0 0.0
        %433 = vmatpush1.msra.mxu0 0.0
        %434 = vmatprep.subr.mxu0 0.0
        %435 = vmatpush1.msra.mxu0 0.0
        %436 = vmatprep.subr.mxu0 0.0
        %437 = vmatpush1.msra.mxu0 0.0
        %438 = vmatprep.subr.mxu0 0.0
        %439 = vmatpush1.msra.mxu0 0.0
        %440 = vmatprep.subr.mxu0 0.0
        %441 = vmatpush1.msra.mxu0 0.0
        %442 = vmatprep.subr.mxu0 0.0
        %443 = vmatpush1.msra.mxu0 0.0
        %444 = vmatprep.mubr.f32.mxu0 0.0
        %445 = vmatmul.mubr.f32.gmra.mrb[0].mxu0 %v378
        %v446 = vpop.f32.mrb[0].mxu0
        %v447 = vadd.f32 %v374, %v446
        %v448 = vpop.f32.mrb[0].mxu0
        %v449 = vadd.f32 %v374, %v448
        %450 = vdwg.mxu0
        %451 = vmatprep.subr.mxu0 0.0
        %452 = vmatpush1.msra.mxu0 %v345
        %453 = vmatprep.subr.mxu0 0.0
        %454 = vmatpush1.msra.mxu0 %v348
        %455 = vmatprep.subr.mxu0 0.0
        %456 = vmatpush1.msra.mxu0 %v351
        %457 = vmatprep.subr.mxu0 0.0
        %458 = vmatpush1.msra.mxu0 %v354
        %459 = vmatprep.subr.mxu0 0.0
        %460 = vmatpush1.msra.mxu0 %v357
        %461 = vmatprep.subr.mxu0 0.0
        %462 = vmatpush1.msra.mxu0 %v360
        %463 = vmatprep.subr.mxu0 0.0
        %464 = vmatpush1.msra.mxu0 %v363
        %465 = vmatprep.subr.mxu0 0.0
        %466 = vmatpush1.msra.mxu0 %v366
        %467 = vmatprep.subr.mxu0 0.0
        %468 = vmatpush1.msra.mxu0 %v369
        %469 = vmatprep.subr.mxu0 0.0
        %470 = vmatpush1.msra.mxu0 0.0
        %471 = vmatprep.subr.mxu0 0.0
        %472 = vmatpush1.msra.mxu0 0.0
        %473 = vmatprep.subr.mxu0 0.0
        %474 = vmatpush1.msra.mxu0 0.0
        %475 = vmatprep.subr.mxu0 0.0
        %476 = vmatpush1.msra.mxu0 0.0
        %477 = vmatprep.subr.mxu0 0.0
        %478 = vmatpush1.msra.mxu0 0.0
        %479 = vmatprep.subr.mxu0 0.0
        %480 = vmatpush1.msra.mxu0 0.0
        %481 = vmatprep.subr.mxu0 0.0
        %482 = vmatpush1.msra.mxu0 0.0
        %483 = vmatprep.subr.mxu0 0.0
        %484 = vmatpush1.msra.mxu0 0.0
        %485 = vmatprep.subr.mxu0 0.0
        %486 = vmatpush1.msra.mxu0 0.0
        %487 = vmatprep.subr.mxu0 0.0
        %488 = vmatpush1.msra.mxu0 0.0
        %489 = vmatprep.subr.mxu0 0.0
        %490 = vmatpush1.msra.mxu0 0.0
        %491 = vmatprep.subr.mxu0 0.0
        %492 = vmatpush1.msra.mxu0 0.0
        %493 = vmatprep.subr.mxu0 0.0
        %494 = vmatpush1.msra.mxu0 0.0
        %495 = vmatprep.subr.mxu0 0.0
        %496 = vmatpush1.msra.mxu0 0.0
        %497 = vmatprep.subr.mxu0 0.0
        %498 = vmatpush1.msra.mxu0 0.0
        %499 = vmatprep.subr.mxu0 0.0
        %500 = vmatpush1.msra.mxu0 0.0
        %501 = vmatprep.subr.mxu0 0.0
        %502 = vmatpush1.msra.mxu0 0.0
        %503 = vmatprep.subr.mxu0 0.0
        %504 = vmatpush1.msra.mxu0 0.0
        %505 = vmatprep.subr.mxu0 0.0
        %506 = vmatpush1.msra.mxu0 0.0
        %507 = vmatprep.subr.mxu0 0.0
        %508 = vmatpush1.msra.mxu0 0.0
        %509 = vmatprep.subr.mxu0 0.0
        %510 = vmatpush1.msra.mxu0 0.0
        %511 = vmatprep.subr.mxu0 0.0
        %512 = vmatpush1.msra.mxu0 0.0
        %513 = vmatprep.subr.mxu0 0.0
        %514 = vmatpush1.msra.mxu0 0.0
        %515 = vmatprep.mubr.f32.mxu0 0.0
        %516 = vmatmul.mubr.f32.gmra.mrb[0].mxu0 %v378
        %v517 = vpop.f32.mrb[0].mxu0
        %v518 = vadd.f32 %v374, %v517
        %v519 = vpop.f32.mrb[0].mxu0
        %520 = vdwg.mxu0
        %521 = vst [vmem:[%s186] sm:$0xff] %v447
        %522 = vst [vmem:[%s186 + $0x8] sm:$0xff] %v449
        %523 = vst [vmem:[%s186 + $0x10] sm:$0xff] %v518
        %s524 = sand.u32 %s96, 1
        %s525 = scalar_lea.sflag [#allocation5], %s524
        %s526 = sand.u32 %s96, 1
        %s527 = smul.addr %s526, 24
        %s528 = scalar_lea.vmem [#allocation6], %s527
        // Predicated region
        $region37: #{tpu_custom_call.1} parent=31 // pred_check
          %p529 = pneg %p106
        $region38: #{tpu_custom_call.1} parent=31 // pred_check_branch
          %531 = sbr.rel (%p529) target = $region40
        $region39: #{tpu_custom_call.1} parent=31 // pred_region
          %s533 = ssub.s32 384, 384
          %534 = vsyncadd %s525, %s533
          %s535 = smul.addr %s20, 3
          %s536 = smul.addr %s535, 128
          %s537 = scalar_lea.hbm %s3, %s536
          %s539 = sshll.u32 %s528, 4
          %s540 = int_to_ptr.vmem [resolvable:$true] %s539
          %542 = dma.vmem_to_hbm [thread:$0]  %s540, 384, %s537, %s525
        $region40: #{tpu_custom_call.1} parent=31 // pred_fallthru
          _
      $region32: #{tpu_custom_call.1} parent=5 // pred_fallthru
        _
      %p543 = scmp.le.s32.totalorder 2, %s15
      // Predicated region
      $region41: #{tpu_custom_call.1} parent=5 // pred_check
        %p544 = pneg %p543
      $region42: #{tpu_custom_call.1} parent=5 // pred_check_branch
        %546 = sbr.rel (%p544) target = $region44
      $region43: #{tpu_custom_call.1} parent=5 // pred_region
        %s547 = ssub.s32 %s15, 2
        // Predicated region
        $region45: #{tpu_custom_call.1} parent=43 // pred_check
          %p548 = pneg %p112
        $region46: #{tpu_custom_call.1} parent=43 // pred_check_branch
          %550 = sbr.rel (%p548) target = $region48
        $region47: #{tpu_custom_call.1} parent=43 // pred_region
          %s551 = sand.u32 %s97, 1
          %s552 = scalar_lea.sflag [#allocation5], %s551
          %s553 = sand.u32 %s97, 1
          %s554 = smul.addr %s553, 24
          %s555 = scalar_lea.vmem [#allocation6], %s554
          %556 = dma.done %s552, 384
        $region48: #{tpu_custom_call.1} parent=43 // pred_fallthru
          _
      $region44: #{tpu_custom_call.1} parent=5 // pred_fallthru
        _
    $region6: #{tpu_custom_call.1} parent=1 // loop_footer
      %s19 = sadd.s32 1, %s15
    $region7: #{tpu_custom_call.1} parent=1 // loop_footer_branch
      %14 = sbr.rel target = $region3
    $region8: #{tpu_custom_call.1} parent=1 // loop_exit
      _
    %557 = vsyncpa [#allocation4], 1
    %s558 = scalar_lea.sflag [#allocation4], 1
    %559 = vsyncpa %s558, 1
    %560 = vsyncpa [#allocation5], 1
    %s561 = scalar_lea.sflag [#allocation5], 1
    %562 = vsyncpa %s561, 1

</llo_original>
